<compile_context>
chip_gen: v7x
topology: tpu7x:2x2x1
jax: 0.10.0
libtpu: 0.0.40
codegen_flags: <defaults>
</compile_context>

<pallas_src>
import functools
import math

import jax
import jax.numpy as jnp
from jax.experimental import pallas as pl
from jax.experimental.pallas import tpu as pltpu


def _round_up(x, m):
    return (x + m - 1) // m * m


def _pair(v):
    if isinstance(v, int):
        return (v, v)
    v = tuple(v)
    return (v[0], v[0]) if len(v) == 1 else (v[0], v[1])


def _same_pad_amounts(H, W, stride, kernel_size):
    """TF-style static SAME padding, exactly as the PyTorch forward computes it."""
    sh, sw = stride
    kh, kw = kernel_size
    extra_h = (math.ceil(W / sw) - 1) * sw - W + kw
    extra_v = (math.ceil(H / sh) - 1) * sh - H + kh
    left = extra_h // 2
    right = extra_h - left
    top = extra_v // 2
    bottom = extra_v - top
    return top, bottom, left, right


def _conv_same_kernel(x_ref, w_ref, b_ref, o_ref, *, KH, KW, SH, SW, Hq):
    """Compute one (batch, H-tile) output block with a single MXU matmul.

    x_ref: (1, SH*SW*Hq, Wq, Cin)  phase-split padded input (resident per batch)
    w_ref: (KH*KW*Cin, Cout_p)     tap-folded weights (resident)
    b_ref: (1, Cout_p)             bias, f32 (resident)
    o_ref: (1, TH, Wo, Cout_p)     output tile, Cout_p % 128 == 0 (lane-dense)
    """
    _, TH, Wo, Cout_p = o_ref.shape
    Cin = x_ref.shape[-1]
    K = KH * KW * Cin

    ht = pl.program_id(1)
    h0 = pl.multiple_of(ht * TH, TH)            # first output row of this tile

    # Gather the KH*KW taps as unit-stride slices of the phase planes and fold
    # them onto the lane (contraction) axis -> one matmul with K = KH*KW*Cin.
    pieces = []
    for kh in range(KH):
        qh, rh = divmod(kh, SH)
        for kw in range(KW):
            qw, rw = divmod(kw, SW)
            row0 = (rh * SW + rw) * Hq + qh     # static phase-plane base row
            pieces.append(x_ref[0, pl.ds(row0 + h0, TH), pl.ds(qw, Wo), :])
    lhs = jnp.concatenate(pieces, axis=-1)      # (TH, Wo, KH*KW*Cin)
    lhs = lhs.reshape(TH * Wo, K)

    acc = jnp.dot(lhs, w_ref[...], preferred_element_type=jnp.float32)
    acc = acc + b_ref[...]                      # (1, Cout_p) broadcast, f32
    o_ref[...] = acc.reshape(1, TH, Wo, Cout_p).astype(o_ref.dtype)


def conv2d_static_same_padding_nhwc(x_nhwc, weight_oihw, bias, *, stride,
                                    kernel_size, block_h=8, use_bf16=False):
    """Conv2dStaticSamePadding.forward on an NHWC input; returns NHWC."""
    sh, sw = _pair(stride)
    kh, kw = _pair(kernel_size)
    N, H, W, Cin = x_nhwc.shape
    Cout = weight_oihw.shape[0]
    if weight_oihw.shape[1] != Cin:
        # TODO(synk): groups > 1 (depthwise separable convs) not implemented.
        raise NotImplementedError("only groups=1 is supported")

    # --- static SAME padding (F.pad semantics: negative amounts crop) -------
    top, bottom, left, right = _same_pad_amounts(H, W, (sh, sw), (kh, kw))
    x = x_nhwc[:, max(0, -top):H - max(0, -bottom),
               max(0, -left):W - max(0, -right), :]
    x = jnp.pad(x, ((0, 0), (max(0, top), max(0, bottom)),
                    (max(0, left), max(0, right)), (0, 0)))
    Hp = H + top + bottom                       # == (Ho - 1) * sh + kh
    Wp = W + left + right                       # == (Wo - 1) * sw + kw
    Ho = (Hp - kh) // sh + 1                    # == ceil(H / sh)
    Wo = (Wp - kw) // sw + 1                    # == ceil(W / sw)

    # --- tile geometry -------------------------------------------------------
    TH = max(1, min(Ho, block_h))               # output rows per grid step
    nHt = (Ho + TH - 1) // TH
    Ho_p = nHt * TH                             # pad so H tiles divide evenly
    Cout_p = _round_up(Cout, 128)               # lane-dense output stores

    # --- space-to-depth phase split: every kernel tap becomes unit-stride ---
    Hq = Ho_p + (kh - 1) // sh                  # rows per phase plane (+halo)
    Wq = Wo + (kw - 1) // sw
    x = jnp.pad(x, ((0, 0), (0, sh * Hq - Hp), (0, sw * Wq - Wp), (0, 0)))
    x = x.reshape(N, Hq, sh, Wq, sw, Cin)
    x = jnp.transpose(x, (0, 2, 4, 1, 3, 5))    # (N, sh, sw, Hq, Wq, Cin)
    x = x.reshape(N, sh * sw * Hq, Wq, Cin)     # phase planes stacked on rows

    compute_dtype = jnp.bfloat16 if use_bf16 else jnp.float32
    x = x.astype(compute_dtype)

    # Tap-folded weights: OIHW -> (KH, KW, Cin, Cout) -> (KH*KW*Cin, Cout_p).
    K = kh * kw * Cin
    w = jnp.transpose(weight_oihw, (2, 3, 1, 0)).reshape(K, Cout)
    w = jnp.pad(w, ((0, 0), (0, Cout_p - Cout))).astype(compute_dtype)
    b = jnp.pad(bias.astype(jnp.float32).reshape(1, Cout),
                ((0, 0), (0, Cout_p - Cout)))

    kernel = functools.partial(_conv_same_kernel,
                               KH=kh, KW=kw, SH=sh, SW=sw, Hq=Hq)

    # VMEM budget: double-buffered in/out blocks + resident weights + im2col.
    isz = jnp.dtype(compute_dtype).itemsize
    in_block = sh * sw * Hq * Wq * Cin * isz
    out_block = TH * Wo * Cout_p * 4
    scratch = TH * Wo * (K * (isz + 4) + Cout_p * 4)
    est = 2 * (in_block + out_block) + K * Cout_p * isz + Cout_p * 4 + scratch
    vmem_limit = int(min(max(2 * est, 32 * 1024 * 1024), 48 * 1024 * 1024))

    out = pl.pallas_call(
        kernel,
        grid=(N, nHt),
        in_specs=[
            # Whole phase-split image of one batch element; the index map is
            # constant along the H-tile axis, so the block stays resident
            # across the H tiles of a batch element (no re-DMA).
            # TODO(synk): halo-blocked input DMA for very large resolutions.
            pl.BlockSpec((1, sh * sw * Hq, Wq, Cin), lambda n, h: (n, 0, 0, 0)),
            pl.BlockSpec((K, Cout_p), lambda n, h: (0, 0)),
            pl.BlockSpec((1, Cout_p), lambda n, h: (0, 0)),
        ],
        out_specs=pl.BlockSpec((1, TH, Wo, Cout_p), lambda n, h: (n, h, 0, 0)),
        out_shape=jax.ShapeDtypeStruct((N, Ho_p, Wo, Cout_p), jnp.float32),
        compiler_params=pltpu.CompilerParams(
            dimension_semantics=("parallel", "parallel"),
            vmem_limit_bytes=vmem_limit,
        ),
    )(x, w, b)

    return out[:, :Ho, :, :Cout]


def conv2d_static_same_padding(x_nchw, weight_oihw, bias, *, stride, kernel_size,
                               block_h=8, use_bf16=False):
    """Drop-in equivalent of the PyTorch module's forward (NCHW in / NCHW out)."""
    # Boundary glue only; prefer the NHWC entry point end-to-end in a BiFPN to
    # avoid these two extra HBM round trips.
    x = jnp.transpose(x_nchw, (0, 2, 3, 1))
    out = conv2d_static_same_padding_nhwc(
        x, weight_oihw, bias, stride=stride, kernel_size=kernel_size,
        block_h=block_h, use_bf16=use_bf16)
    return jnp.transpose(out, (0, 3, 1, 2))


def _reference(x_nchw, weight_oihw, bias, *, stride, kernel_size):
    sh, sw = _pair(stride)
    _, _, H, W = x_nchw.shape
    top, bottom, left, right = _same_pad_amounts(H, W, (sh, sw), _pair(kernel_size))
    x = x_nchw[:, :, max(0, -top):H - max(0, -bottom),
               max(0, -left):W - max(0, -right)]
    x = jnp.pad(x, ((0, 0), (0, 0), (max(0, top), max(0, bottom)),
                    (max(0, left), max(0, right))))
    out = jax.lax.conv_general_dilated(
        x, weight_oihw, window_strides=(sh, sw), padding=((0, 0), (0, 0)),
        dimension_numbers=("NCHW", "OIHW", "NCHW"),
        precision=jax.lax.Precision.HIGHEST)
    return out + bias.reshape(1, -1, 1, 1)


if __name__ == "__main__":
    key = jax.random.PRNGKey(0)
    # (name, N, Cin, H, W, Cout, KH, KW, stride, use_bf16, atol, rtol)
    cases = [
        ("3x3_s1_f32", 2, 4, 16, 16, 8, 3, 3, (1, 1), False, 1e-4, 1e-4),
        ("3x3_s2_f32", 2, 4, 15, 15, 8, 3, 3, (2, 2), False, 1e-4, 1e-4),
        ("1x1_s2_f32", 1, 4, 16, 16, 8, 1, 1, (2, 2), False, 1e-4, 1e-4),  # negative SAME pad (crop)
        ("3x3_s1_bf16", 2, 4, 16, 16, 8, 3, 3, (1, 1), True, 5e-2, 5e-2),
    ]
    for idx, (name, N, Cin, H, W, Cout, KH, KW, stride,
              use_bf16, atol, rtol) in enumerate(cases):
        kx, kw_, kb = jax.random.split(jax.random.fold_in(key, idx), 3)
        x = jax.random.normal(kx, (N, Cin, H, W), dtype=jnp.float32)
        weight = jax.random.normal(kw_, (Cout, Cin, KH, KW), dtype=jnp.float32) * 0.1
        bias = jax.random.normal(kb, (Cout,), dtype=jnp.float32) * 0.1

        out = conv2d_static_same_padding(
            x, weight, bias, stride=stride, kernel_size=(KH, KW),
            use_bf16=use_bf16)
        out = jax.block_until_ready(out)

        ref = _reference(x, weight, bias, stride=stride, kernel_size=(KH, KW))
        assert out.shape == ref.shape, (name, out.shape, ref.shape)
        err = float(jnp.max(jnp.abs(out - ref)))
        assert jnp.allclose(out, ref, atol=atol, rtol=rtol), (name, err)

    print("KERNEL_OK")
</pallas_src>

<mosaic_0001>
module attributes {stable_mosaic.version = 11 : i64} {
  func.func @_conv_same_kernel(%arg0: i32, %arg1: i32, %arg2: memref<1x18x18x4xf32, #tpu.memory_space<vmem>>, %arg3: memref<36x128xf32, #tpu.memory_space<vmem>>, %arg4: memref<1x128xf32, #tpu.memory_space<vmem>>, %arg5: memref<1x8x16x128xf32, #tpu.memory_space<vmem>>) attributes {dimension_semantics = [#tpu.dimension_semantics<parallel>, #tpu.dimension_semantics<parallel>], iteration_bounds = array<i64: 2, 2>, scalar_prefetch = 0 : i64, scratch_operands = 0 : i64, tpu.core_type = #tpu.core_type<tc>, window_params = [{transform_indices = @transform_0, window_bounds = array<i64: 1, 18, 18, 4>}, {pipeline_mode = #tpu.pipeline_mode<synchronous>, transform_indices = @transform_1, window_bounds = array<i64: 36, 128>}, {pipeline_mode = #tpu.pipeline_mode<synchronous>, transform_indices = @transform_2, window_bounds = array<i64: 1, 128>}, {transform_indices = @transform_3, window_bounds = array<i64: 1, 8, 16, 128>}]} {
    %c8_i32 = arith.constant 8 : i32
    %0 = arith.muli %arg1, %c8_i32 : i32
    %1 = tpu.assume_multiple %0, 8 : i32
    %c0_i32 = arith.constant 0 : i32
    %2 = arith.addi %c0_i32, %1 : i32
    %c0 = arith.constant 0 : index
    %3 = arith.index_cast %2 : i32 to index
    %c0_0 = arith.constant 0 : index
    %c0_1 = arith.constant 0 : index
    %4 = vector.load %arg2[%c0, %3, %c0_0, %c0_1] : memref<1x18x18x4xf32, #tpu.memory_space<vmem>>, vector<1x8x16x4xf32>
    %5 = vector.shape_cast %4 : vector<1x8x16x4xf32> to vector<8x16x4xf32>
    %c0_i32_2 = arith.constant 0 : i32
    %6 = arith.addi %c0_i32_2, %1 : i32
    %c0_3 = arith.constant 0 : index
    %7 = arith.index_cast %6 : i32 to index
    %c1 = arith.constant 1 : index
    %c0_4 = arith.constant 0 : index
    %8 = vector.load %arg2[%c0_3, %7, %c1, %c0_4] : memref<1x18x18x4xf32, #tpu.memory_space<vmem>>, vector<1x8x16x4xf32>
    %9 = vector.shape_cast %8 : vector<1x8x16x4xf32> to vector<8x16x4xf32>
    %c0_i32_5 = arith.constant 0 : i32
    %10 = arith.addi %c0_i32_5, %1 : i32
    %c0_6 = arith.constant 0 : index
    %11 = arith.index_cast %10 : i32 to index
    %c2 = arith.constant 2 : index
    %c0_7 = arith.constant 0 : index
    %12 = vector.load %arg2[%c0_6, %11, %c2, %c0_7] : memref<1x18x18x4xf32, #tpu.memory_space<vmem>>, vector<1x8x16x4xf32>
    %13 = vector.shape_cast %12 : vector<1x8x16x4xf32> to vector<8x16x4xf32>
    %c1_i32 = arith.constant 1 : i32
    %14 = arith.addi %c1_i32, %1 : i32
    %c0_8 = arith.constant 0 : index
    %15 = arith.index_cast %14 : i32 to index
    %c0_9 = arith.constant 0 : index
    %c0_10 = arith.constant 0 : index
    %16 = vector.load %arg2[%c0_8, %15, %c0_9, %c0_10] : memref<1x18x18x4xf32, #tpu.memory_space<vmem>>, vector<1x8x16x4xf32>
    %17 = vector.shape_cast %16 : vector<1x8x16x4xf32> to vector<8x16x4xf32>
    %c1_i32_11 = arith.constant 1 : i32
    %18 = arith.addi %c1_i32_11, %1 : i32
    %c0_12 = arith.constant 0 : index
    %19 = arith.index_cast %18 : i32 to index
    %c1_13 = arith.constant 1 : index
    %c0_14 = arith.constant 0 : index
    %20 = vector.load %arg2[%c0_12, %19, %c1_13, %c0_14] : memref<1x18x18x4xf32, #tpu.memory_space<vmem>>, vector<1x8x16x4xf32>
    %21 = vector.shape_cast %20 : vector<1x8x16x4xf32> to vector<8x16x4xf32>
    %c1_i32_15 = arith.constant 1 : i32
    %22 = arith.addi %c1_i32_15, %1 : i32
    %c0_16 = arith.constant 0 : index
    %23 = arith.index_cast %22 : i32 to index
    %c2_17 = arith.constant 2 : index
    %c0_18 = arith.constant 0 : index
    %24 = vector.load %arg2[%c0_16, %23, %c2_17, %c0_18] : memref<1x18x18x4xf32, #tpu.memory_space<vmem>>, vector<1x8x16x4xf32>
    %25 = vector.shape_cast %24 : vector<1x8x16x4xf32> to vector<8x16x4xf32>
    %c2_i32 = arith.constant 2 : i32
    %26 = arith.addi %c2_i32, %1 : i32
    %c0_19 = arith.constant 0 : index
    %27 = arith.index_cast %26 : i32 to index
    %c0_20 = arith.constant 0 : index
    %c0_21 = arith.constant 0 : index
    %28 = vector.load %arg2[%c0_19, %27, %c0_20, %c0_21] : memref<1x18x18x4xf32, #tpu.memory_space<vmem>>, vector<1x8x16x4xf32>
    %29 = vector.shape_cast %28 : vector<1x8x16x4xf32> to vector<8x16x4xf32>
    %c2_i32_22 = arith.constant 2 : i32
    %30 = arith.addi %c2_i32_22, %1 : i32
    %c0_23 = arith.constant 0 : index
    %31 = arith.index_cast %30 : i32 to index
    %c1_24 = arith.constant 1 : index
    %c0_25 = arith.constant 0 : index
    %32 = vector.load %arg2[%c0_23, %31, %c1_24, %c0_25] : memref<1x18x18x4xf32, #tpu.memory_space<vmem>>, vector<1x8x16x4xf32>
    %33 = vector.shape_cast %32 : vector<1x8x16x4xf32> to vector<8x16x4xf32>
    %c2_i32_26 = arith.constant 2 : i32
    %34 = arith.addi %c2_i32_26, %1 : i32
    %c0_27 = arith.constant 0 : index
    %35 = arith.index_cast %34 : i32 to index
    %c2_28 = arith.constant 2 : index
    %c0_29 = arith.constant 0 : index
    %36 = vector.load %arg2[%c0_27, %35, %c2_28, %c0_29] : memref<1x18x18x4xf32, #tpu.memory_space<vmem>>, vector<1x8x16x4xf32>
    %37 = vector.shape_cast %36 : vector<1x8x16x4xf32> to vector<8x16x4xf32>
    %38 = tpu.concatenate %5, %9, %13, %17, %21, %25, %29, %33, %37 in 2 : vector<8x16x4xf32>, vector<8x16x4xf32>, vector<8x16x4xf32>, vector<8x16x4xf32>, vector<8x16x4xf32>, vector<8x16x4xf32>, vector<8x16x4xf32>, vector<8x16x4xf32>, vector<8x16x4xf32> -> vector<8x16x36xf32>
    %39 = vector.shape_cast %38 : vector<8x16x36xf32> to vector<128x36xf32>
    %c0_30 = arith.constant 0 : index
    %c0_31 = arith.constant 0 : index
    %40 = vector.load %arg3[%c0_30, %c0_31] : memref<36x128xf32, #tpu.memory_space<vmem>>, vector<36x128xf32>
    %cst = arith.constant dense<0.000000e+00> : vector<128x128xf32>
    %41 = tpu.matmul %39, %40, %cst {dimension_numbers = #tpu.dot_dimension_numbers<[1], [0], [0], [1], [0, 0, 1, 1], [], []>} : vector<128x36xf32>, vector<36x128xf32>, vector<128x128xf32> -> vector<128x128xf32>
    %c0_32 = arith.constant 0 : index
    %c0_33 = arith.constant 0 : index
    %42 = vector.load %arg4[%c0_32, %c0_33] : memref<1x128xf32, #tpu.memory_space<vmem>>, vector<1x128xf32>
    %43 = vector.broadcast %42 : vector<1x128xf32> to vector<128x128xf32>
    %44 = arith.addf %41, %43 : vector<128x128xf32>
    %45 = vector.shape_cast %44 : vector<128x128xf32> to vector<1x8x16x128xf32>
    %c0_34 = arith.constant 0 : index
    %c0_35 = arith.constant 0 : index
    %c0_36 = arith.constant 0 : index
    %c0_37 = arith.constant 0 : index
    %46 = vector.load %arg5[%c0_34, %c0_35, %c0_36, %c0_37] : memref<1x8x16x128xf32, #tpu.memory_space<vmem>>, vector<1x8x16x128xf32>
    tpu.vector_store %arg5[%c0_34, %c0_35, %c0_36, %c0_37], %45 {strides = array<i32>} : memref<1x8x16x128xf32, #tpu.memory_space<vmem>>, vector<1x8x16x128xf32>,
    return
  }
  func.func @transform_0(%arg0: i32, %arg1: i32) -> (i32, i32, i32, i32) {
    %c0_i32 = arith.constant 0 : i32
    %c0_i32_0 = arith.constant 0 : i32
    %c0_i32_1 = arith.constant 0 : i32
    %c0_i32_2 = arith.constant 0 : i32
    return %arg0, %c0_i32, %c0_i32_0, %c0_i32_1 : i32, i32, i32, i32
  }
  func.func @transform_1(%arg0: i32, %arg1: i32) -> (i32, i32) {
    %c0_i32 = arith.constant 0 : i32
    %c0_i32_0 = arith.constant 0 : i32
    %c0_i32_1 = arith.constant 0 : i32
    return %c0_i32, %c0_i32_0 : i32, i32
  }
  func.func @transform_2(%arg0: i32, %arg1: i32) -> (i32, i32) {
    %c0_i32 = arith.constant 0 : i32
    %c0_i32_0 = arith.constant 0 : i32
    %c0_i32_1 = arith.constant 0 : i32
    return %c0_i32, %c0_i32_0 : i32, i32
  }
  func.func @transform_3(%arg0: i32, %arg1: i32) -> (i32, i32, i32, i32) {
    %c0_i32 = arith.constant 0 : i32
    %c0_i32_0 = arith.constant 0 : i32
    %c0_i32_1 = arith.constant 0 : i32
    return %arg0, %arg1, %c0_i32, %c0_i32_0 : i32, i32, i32, i32
  }
}

</mosaic_0001>

<llo_original>
// kernel: tpu_custom_call.1
$region0: #{tpu_custom_call.1}
  #allocation0 [shape = 'u32[]', space=smem, size = 0x4, offset = 0x4, fixed_abs, tag = 'smem constant byte address 0x4 - core index']
  #allocation1 [shape = 'u32[144,128]{1,0:T(1,128)}', space=vmem, size = 0x12000, scoped, tag = 'internal scratch']
  %s0 = inlined_call_operand.vmem [shape: f32[2,18,18,4], index: 0, kind: input, shape index: {}]
  %s1 = inlined_call_operand.vmem [shape: f32[36,128], index: 1, kind: input, shape index: {}]
  %s2 = inlined_call_operand.vmem [shape: f32[1,128], index: 2, kind: input, shape index: {}]
  %s3 = inlined_call_operand.hbm [shape: f32[2,16,16,128], index: 3, kind: output, shape index: {}]
  %s4 = sld [smem:[#allocation0]]
  $region45: #{tpu_custom_call.1} parent=0
    _
  %s6 = ssub.s32 1, %s4
  %s7 = scalar_select 0, %s6, %s4
  $region1: #{tpu_custom_call.1} parent=0
    #allocation2 [shape = 'u8[131072]{0}', space=vmem, size = 0x20000, scoped, tag = 'output window, operand 0']
    #allocation3 [shape = 's32[2]{0}', space=sflag, size = 0x8, scoped, tag = 'scoped memory for tpu_custom_call.1']
    %8 = vsyncpa [#allocation3], 0
    %s9 = scalar_lea.sflag [#allocation3], 1
    %10 = vsyncpa %s9, 0
    loop: start=0, step=1, limit=6
    $region2: #{tpu_custom_call.1} parent=1 // loop_pre_header
      _
    $region3: #{tpu_custom_call.1} parent=1 // loop_header
      %s12 = sphi 0, %s16
      %p13 = scmp.ge.s32.totalorder %s12, 6
      %s19 = sphi 0, %s31
      %s20 = sphi 0, %s27
      %s21 = sphi 0, %s19
      %s22 = sphi 0, %s20
      %s23 = sphi 0, %s21
      %s24 = sphi 0, %s22
      %s34 = sphi 0, %s36
      %s37 = sphi 0, %s34
      %s38 = sphi 0, %s37
      %s54 = sphi 0, %s38
      %s58 = sphi 0, %s58
      %s60 = sphi 0, %s58
      %s61 = sphi 0, %s60
      %s75 = sphi 0, %s61
      %s79 = sphi 0, %s79
      %s81 = sphi 0, %s79
      %s82 = sphi 0, %s81
      %s96 = sphi 0, %s82
      %s104 = sphi 0, %s106
      %s107 = sphi 0, %s104
      %s108 = sphi 0, %s107
      %s124 = sphi 0, %s108
    $region4: #{tpu_custom_call.1} parent=1 // loop_header_branch
      %15 = sbr.rel (%p13) target = $region8
    $region5: #{tpu_custom_call.1} parent=1 // loop_body
      %s17 = ssub.s32 %s12, 1
      %s18 = ssub.s32 %s12, 2
      %s25 = sadd.s32 1, %s20
      %p26 = scmp.ge.s32.totalorder %s25, 2
      %s27 = scalar_select %p26, 0, %s25
      %s28 = sadd.s32 1, %s19
      %s29 = scalar_select %p26, %s28, %s19
      %p30 = scmp.ge.s32.totalorder %s29, 2
      %s31 = scalar_select %p30, 0, %s29
      %s32 = ssub.s32 %s19, %s31
      %p33 = scmp.eq.s32.totalorder %s32, 0
      %s35 = sadd.s32 %s34, 1
      %s36 = scalar_select %p33, %s34, %s35
      %p39 = pneg %p33
      %p40 = scmp.eq.s32.totalorder %s12, 3
      %p41 = por %p39, %p40
      %p42 = scmp.ne.s32.totalorder %s34, %s37
      %p43 = scmp.eq.s32.totalorder %s12, 0
      %p44 = por %p42, %p43
      %p45 = scmp.ne.s32.totalorder %s34, %s37
      %p46 = scmp.eq.s32.totalorder %s17, 3
      %p47 = por %p45, %p46
      %p48 = scmp.ne.s32.totalorder %s37, %s38
      %p49 = scmp.eq.s32.totalorder %s17, 0
      %p50 = por %p48, %p49
      %p51 = scmp.ne.s32.totalorder %s37, %s38
      %p52 = scmp.eq.s32.totalorder %s18, 3
      %p53 = por %p51, %p52
      %p55 = scmp.ne.s32.totalorder %s38, %s54
      %p56 = scmp.eq.s32.totalorder %s18, 0
      %p57 = por %p55, %p56
      %s59 = sadd.s32 %s58, 1
      %p62 = scmp.eq.s32.totalorder %s12, 3
      %p63 = scmp.ne.s32.totalorder %s58, %s60
      %p64 = scmp.eq.s32.totalorder %s12, 0
      %p65 = por %p63, %p64
      %p66 = scmp.ne.s32.totalorder %s58, %s60
      %p67 = scmp.eq.s32.totalorder %s17, 3
      %p68 = por %p66, %p67
      %p69 = scmp.ne.s32.totalorder %s60, %s61
      %p70 = scmp.eq.s32.totalorder %s17, 0
      %p71 = por %p69, %p70
      %p72 = scmp.ne.s32.totalorder %s60, %s61
      %p73 = scmp.eq.s32.totalorder %s18, 3
      %p74 = por %p72, %p73
      %p76 = scmp.ne.s32.totalorder %s61, %s75
      %p77 = scmp.eq.s32.totalorder %s18, 0
      %p78 = por %p76, %p77
      %s80 = sadd.s32 %s79, 1
      %p83 = scmp.eq.s32.totalorder %s12, 3
      %p84 = scmp.ne.s32.totalorder %s79, %s81
      %p85 = scmp.eq.s32.totalorder %s12, 0
      %p86 = por %p84, %p85
      %p87 = scmp.ne.s32.totalorder %s79, %s81
      %p88 = scmp.eq.s32.totalorder %s17, 3
      %p89 = por %p87, %p88
      %p90 = scmp.ne.s32.totalorder %s81, %s82
      %p91 = scmp.eq.s32.totalorder %s17, 0
      %p92 = por %p90, %p91
      %p93 = scmp.ne.s32.totalorder %s81, %s82
      %p94 = scmp.eq.s32.totalorder %s18, 3
      %p95 = por %p93, %p94
      %p97 = scmp.ne.s32.totalorder %s82, %s96
      %p98 = scmp.eq.s32.totalorder %s18, 0
      %p99 = por %p97, %p98
      %s100 = ssub.s32 %s19, %s31
      %s101 = ssub.s32 %s20, %s27
      %s102 = sor.u32 %s100, %s101
      %p103 = scmp.eq.s32.totalorder %s102, 0
      %s105 = sadd.s32 %s104, 1
      %s106 = scalar_select %p103, %s104, %s105
      %p109 = pneg %p103
      %p110 = scmp.eq.s32.totalorder %s12, 3
      %p111 = por %p109, %p110
      %p112 = scmp.ne.s32.totalorder %s104, %s107
      %p113 = scmp.eq.s32.totalorder %s12, 0
      %p114 = por %p112, %p113
      %p115 = scmp.ne.s32.totalorder %s104, %s107
      %p116 = scmp.eq.s32.totalorder %s17, 3
      %p117 = por %p115, %p116
      %p118 = scmp.ne.s32.totalorder %s107, %s108
      %p119 = scmp.eq.s32.totalorder %s17, 0
      %p120 = por %p118, %p119
      %p121 = scmp.ne.s32.totalorder %s107, %s108
      %p122 = scmp.eq.s32.totalorder %s18, 3
      %p123 = por %p121, %p122
      %p125 = scmp.ne.s32.totalorder %s108, %s124
      %p126 = scmp.eq.s32.totalorder %s18, 0
      %p127 = por %p125, %p126
      %p128 = scmp.le.s32.totalorder 1, %s12
      %p129 = scmp.lt.s32.totalorder %s12, 5
      %p130 = pnand %p128, %p129
      %p131 = pneg %p130
      // Predicated region
      $region9: #{tpu_custom_call.1} parent=5 // pred_check
        _
      $region10: #{tpu_custom_call.1} parent=5 // pred_check_branch
        %133 = sbr.rel (%p130) target = $region12
      $region11: #{tpu_custom_call.1} parent=5 // pred_region
        %s134 = ssub.s32 %s12, 1
        // Predicated region
        $region13: #{tpu_custom_call.1} parent=11 // pred_check
          %p135 = pneg %p71
        $region14: #{tpu_custom_call.1} parent=11 // pred_check_branch
          %137 = sbr.rel (%p135) target = $region16
        $region15: #{tpu_custom_call.1} parent=11 // pred_region
          _
        $region16: #{tpu_custom_call.1} parent=11 // pred_fallthru
          _
        // Predicated region
        $region17: #{tpu_custom_call.1} parent=11 // pred_check
          %p138 = pneg %p92
        $region18: #{tpu_custom_call.1} parent=11 // pred_check_branch
          %140 = sbr.rel (%p138) target = $region20
        $region19: #{tpu_custom_call.1} parent=11 // pred_region
          _
        $region20: #{tpu_custom_call.1} parent=11 // pred_fallthru
          _
      $region12: #{tpu_custom_call.1} parent=5 // pred_fallthru
        _
      %p141 = scmp.lt.s32.totalorder %s12, 4
      // Predicated region
      $region21: #{tpu_custom_call.1} parent=5 // pred_check
        %p142 = pneg %p141
      $region22: #{tpu_custom_call.1} parent=5 // pred_check_branch
        %144 = sbr.rel (%p142) target = $region24
      $region23: #{tpu_custom_call.1} parent=5 // pred_region
        // Predicated region
        $region25: #{tpu_custom_call.1} parent=23 // pred_check
          %p145 = pneg %p44
        $region26: #{tpu_custom_call.1} parent=23 // pred_check_branch
          %147 = sbr.rel (%p145) target = $region28
        $region27: #{tpu_custom_call.1} parent=23 // pred_region
          %p148 = scmp.lt.s32.totalorder %s19, 1
          %s149 = scalar_select %p148, %s19, 1
          %s150 = smul.addr %s149, 54
          %s151 = smul.addr %s150, 8
          %s152 = scalar_lea.vmem %s0, %s151
        $region28: #{tpu_custom_call.1} parent=23 // pred_fallthru
          _
      $region24: #{tpu_custom_call.1} parent=5 // pred_fallthru
        _
      %p153 = scmp.le.s32.totalorder 1, %s12
      %p154 = scmp.lt.s32.totalorder %s12, 5
      %p155 = pnand %p153, %p154
      %p156 = pneg %p155
      // Predicated region
      $region29: #{tpu_custom_call.1} parent=5 // pred_check
        _
      $region30: #{tpu_custom_call.1} parent=5 // pred_check_branch
        %158 = sbr.rel (%p155) target = $region32
      $region31: #{tpu_custom_call.1} parent=5 // pred_region
        %s159 = ssub.s32 %s12, 1
        %p160 = scmp.lt.s32.totalorder %s21, 1
        %s161 = scalar_select %p160, %s21, 1
        %s162 = smul.addr %s161, 54
        %s163 = smul.addr %s162, 8
        %s164 = scalar_lea.vmem %s0, %s163
        %p165 = pneg %p50
        %p166 = pneg %p47
        %p167 = pneg %p71
        %p168 = pneg %p68
        %p169 = pneg %p92
        %p170 = pneg %p89
        %p171 = pneg %p120
        %p172 = pneg %p117
        %s173 = sand.u32 %s107, 1
        %s174 = scalar_lea.sflag [#allocation3], %s173
        %s175 = sand.u32 %s107, 1
        %s176 = smul.addr %s175, 128
        %s177 = scalar_lea.vmem [#allocation2], %s176
        %p178 = scmp.lt.s32.totalorder %s21, 1
        %s179 = scalar_select %p178, %s21, 1
        %s180 = smul.addr %s179, 54
        %s181 = smul.addr %s180, 8
        %s182 = scalar_lea.vmem %s0, %s181
        %s183 = smul.u32 8, %s22
        %s184 = smul.u32 %s22, 8
        %s185 = smul.u32 %s184, 24
        %s186 = scalar_lea.vmem %s182, %s185
        %v187 = vld [vmem:[%s186] sm:$0xff]
        %v188 = vld [vmem:[%s186 + $0x8] sm:$0xff]
        %v189 = vld [vmem:[%s186 + $0x18] sm:$0xff]
        %v190 = vld [vmem:[%s186 + $0x20] sm:$0xff]
        %v191 = vld [vmem:[%s186 + $0x30] sm:$0xff]
        %v192 = vld [vmem:[%s186 + $0x38] sm:$0xff]
        %v193 = vld [vmem:[%s186 + $0x48] sm:$0xff]
        %v194 = vld [vmem:[%s186 + $0x50] sm:$0xff]
        %v195 = vld [vmem:[%s186 + $0x60] sm:$0xff]
        %v196 = vld [vmem:[%s186 + $0x68] sm:$0xff]
        %v197 = vld [vmem:[%s186 + $0x78] sm:$0xff]
        %v198 = vld [vmem:[%s186 + $0x80] sm:$0xff]
        %v199 = vld [vmem:[%s186 + $0x90] sm:$0xff]
        %v200 = vld [vmem:[%s186 + $0x98] sm:$0xff]
        %v201 = vld [vmem:[%s186 + $0xa8] sm:$0xff]
        %v202 = vld [vmem:[%s186 + $0xb0] sm:$0xff]
        %v203 = vld [vmem:[%s186 + $0x1] sm:$0xff]
        %v204 = vld [vmem:[%s186 + $0x9] sm:$0xff]
        %v205 = vld [vmem:[%s186 + $0x19] sm:$0xff]
        %v206 = vld [vmem:[%s186 + $0x21] sm:$0xff]
        %v207 = vld [vmem:[%s186 + $0x31] sm:$0xff]
        %v208 = vld [vmem:[%s186 + $0x39] sm:$0xff]
        %v209 = vld [vmem:[%s186 + $0x49] sm:$0xff]
        %v210 = vld [vmem:[%s186 + $0x51] sm:$0xff]
        %v211 = vld [vmem:[%s186 + $0x61] sm:$0xff]
        %v212 = vld [vmem:[%s186 + $0x69] sm:$0xff]
        %v213 = vld [vmem:[%s186 + $0x79] sm:$0xff]
        %v214 = vld [vmem:[%s186 + $0x81] sm:$0xff]
        %v215 = vld [vmem:[%s186 + $0x91] sm:$0xff]
        %v216 = vld [vmem:[%s186 + $0x99] sm:$0xff]
        %v217 = vld [vmem:[%s186 + $0xa9] sm:$0xff]
        %v218 = vld [vmem:[%s186 + $0xb1] sm:$0xff]
        %v219 = vld [vmem:[%s186 + $0x2] sm:$0xff]
        %v220 = vld [vmem:[%s186 + $0xa] sm:$0xff]
        %v221 = vld [vmem:[%s186 + $0x1a] sm:$0xff]
        %v222 = vld [vmem:[%s186 + $0x22] sm:$0xff]
        %v223 = vld [vmem:[%s186 + $0x32] sm:$0xff]
        %v224 = vld [vmem:[%s186 + $0x3a] sm:$0xff]
        %v225 = vld [vmem:[%s186 + $0x4a] sm:$0xff]
        %v226 = vld [vmem:[%s186 + $0x52] sm:$0xff]
        %v227 = vld [vmem:[%s186 + $0x62] sm:$0xff]
        %v228 = vld [vmem:[%s186 + $0x6a] sm:$0xff]
        %v229 = vld [vmem:[%s186 + $0x7a] sm:$0xff]
        %v230 = vld [vmem:[%s186 + $0x82] sm:$0xff]
        %v231 = vld [vmem:[%s186 + $0x92] sm:$0xff]
        %v232 = vld [vmem:[%s186 + $0x9a] sm:$0xff]
        %v233 = vld [vmem:[%s186 + $0xaa] sm:$0xff]
        %v234 = vld [vmem:[%s186 + $0xb2] sm:$0xff]
        %s235 = sadd.s32 %s184, 1
        %s236 = smul.u32 %s235, 24
        %s237 = scalar_lea.vmem %s182, %s236
        %v238 = vld [vmem:[%s237] sm:$0xff]
        %v239 = vld [vmem:[%s237 + $0x8] sm:$0xff]
        %v240 = vld [vmem:[%s237 + $0x18] sm:$0xff]
        %v241 = vld [vmem:[%s237 + $0x20] sm:$0xff]
        %v242 = vld [vmem:[%s237 + $0x30] sm:$0xff]
        %v243 = vld [vmem:[%s237 + $0x38] sm:$0xff]
        %v244 = vld [vmem:[%s237 + $0x48] sm:$0xff]
        %v245 = vld [vmem:[%s237 + $0x50] sm:$0xff]
        %v246 = vld [vmem:[%s237 + $0x60] sm:$0xff]
        %v247 = vld [vmem:[%s237 + $0x68] sm:$0xff]
        %v248 = vld [vmem:[%s237 + $0x78] sm:$0xff]
        %v249 = vld [vmem:[%s237 + $0x80] sm:$0xff]
        %v250 = vld [vmem:[%s237 + $0x90] sm:$0xff]
        %v251 = vld [vmem:[%s237 + $0x98] sm:$0xff]
        %v252 = vld [vmem:[%s237 + $0xa8] sm:$0xff]
        %v253 = vld [vmem:[%s237 + $0xb0] sm:$0xff]
        %v254 = vld [vmem:[%s237 + $0x1] sm:$0xff]
        %v255 = vld [vmem:[%s237 + $0x9] sm:$0xff]
        %v256 = vld [vmem:[%s237 + $0x19] sm:$0xff]
        %v257 = vld [vmem:[%s237 + $0x21] sm:$0xff]
        %v258 = vld [vmem:[%s237 + $0x31] sm:$0xff]
        %v259 = vld [vmem:[%s237 + $0x39] sm:$0xff]
        %v260 = vld [vmem:[%s237 + $0x49] sm:$0xff]
        %v261 = vld [vmem:[%s237 + $0x51] sm:$0xff]
        %v262 = vld [vmem:[%s237 + $0x61] sm:$0xff]
        %v263 = vld [vmem:[%s237 + $0x69] sm:$0xff]
        %v264 = vld [vmem:[%s237 + $0x79] sm:$0xff]
        %v265 = vld [vmem:[%s237 + $0x81] sm:$0xff]
        %v266 = vld [vmem:[%s237 + $0x91] sm:$0xff]
        %v267 = vld [vmem:[%s237 + $0x99] sm:$0xff]
        %v268 = vld [vmem:[%s237 + $0xa9] sm:$0xff]
        %v269 = vld [vmem:[%s237 + $0xb1] sm:$0xff]
        %v270 = vld [vmem:[%s237 + $0x2] sm:$0xff]
        %v271 = vld [vmem:[%s237 + $0xa] sm:$0xff]
        %v272 = vld [vmem:[%s237 + $0x1a] sm:$0xff]
        %v273 = vld [vmem:[%s237 + $0x22] sm:$0xff]
        %v274 = vld [vmem:[%s237 + $0x32] sm:$0xff]
        %v275 = vld [vmem:[%s237 + $0x3a] sm:$0xff]
        %v276 = vld [vmem:[%s237 + $0x4a] sm:$0xff]
        %v277 = vld [vmem:[%s237 + $0x52] sm:$0xff]
        %v278 = vld [vmem:[%s237 + $0x62] sm:$0xff]
        %v279 = vld [vmem:[%s237 + $0x6a] sm:$0xff]
        %v280 = vld [vmem:[%s237 + $0x7a] sm:$0xff]
        %v281 = vld [vmem:[%s237 + $0x82] sm:$0xff]
        %v282 = vld [vmem:[%s237 + $0x92] sm:$0xff]
        %v283 = vld [vmem:[%s237 + $0x9a] sm:$0xff]
        %v284 = vld [vmem:[%s237 + $0xaa] sm:$0xff]
        %v285 = vld [vmem:[%s237 + $0xb2] sm:$0xff]
        %s286 = sadd.s32 %s184, 2
        %s287 = smul.u32 %s286, 24
        %s288 = scalar_lea.vmem %s182, %s287
        %v289 = vld [vmem:[%s288] sm:$0xff]
        %v290 = vld [vmem:[%s288 + $0x8] sm:$0xff]
        %v291 = vld [vmem:[%s288 + $0x18] sm:$0xff]
        %v292 = vld [vmem:[%s288 + $0x20] sm:$0xff]
        %v293 = vld [vmem:[%s288 + $0x30] sm:$0xff]
        %v294 = vld [vmem:[%s288 + $0x38] sm:$0xff]
        %v295 = vld [vmem:[%s288 + $0x48] sm:$0xff]
        %v296 = vld [vmem:[%s288 + $0x50] sm:$0xff]
        %v297 = vld [vmem:[%s288 + $0x60] sm:$0xff]
        %v298 = vld [vmem:[%s288 + $0x68] sm:$0xff]
        %v299 = vld [vmem:[%s288 + $0x78] sm:$0xff]
        %v300 = vld [vmem:[%s288 + $0x80] sm:$0xff]
        %v301 = vld [vmem:[%s288 + $0x90] sm:$0xff]
        %v302 = vld [vmem:[%s288 + $0x98] sm:$0xff]
        %v303 = vld [vmem:[%s288 + $0xa8] sm:$0xff]
        %v304 = vld [vmem:[%s288 + $0xb0] sm:$0xff]
        %v305 = vld [vmem:[%s288 + $0x1] sm:$0xff]
        %v306 = vld [vmem:[%s288 + $0x9] sm:$0xff]
        %v307 = vld [vmem:[%s288 + $0x19] sm:$0xff]
        %v308 = vld [vmem:[%s288 + $0x21] sm:$0xff]
        %v309 = vld [vmem:[%s288 + $0x31] sm:$0xff]
        %v310 = vld [vmem:[%s288 + $0x39] sm:$0xff]
        %v311 = vld [vmem:[%s288 + $0x49] sm:$0xff]
        %v312 = vld [vmem:[%s288 + $0x51] sm:$0xff]
        %v313 = vld [vmem:[%s288 + $0x61] sm:$0xff]
        %v314 = vld [vmem:[%s288 + $0x69] sm:$0xff]
        %v315 = vld [vmem:[%s288 + $0x79] sm:$0xff]
        %v316 = vld [vmem:[%s288 + $0x81] sm:$0xff]
        %v317 = vld [vmem:[%s288 + $0x91] sm:$0xff]
        %v318 = vld [vmem:[%s288 + $0x99] sm:$0xff]
        %v319 = vld [vmem:[%s288 + $0xa9] sm:$0xff]
        %v320 = vld [vmem:[%s288 + $0xb1] sm:$0xff]
        %v321 = vld [vmem:[%s288 + $0x2] sm:$0xff]
        %v322 = vld [vmem:[%s288 + $0xa] sm:$0xff]
        %v323 = vld [vmem:[%s288 + $0x1a] sm:$0xff]
        %v324 = vld [vmem:[%s288 + $0x22] sm:$0xff]
        %v325 = vld [vmem:[%s288 + $0x32] sm:$0xff]
        %v326 = vld [vmem:[%s288 + $0x3a] sm:$0xff]
        %v327 = vld [vmem:[%s288 + $0x4a] sm:$0xff]
        %v328 = vld [vmem:[%s288 + $0x52] sm:$0xff]
        %v329 = vld [vmem:[%s288 + $0x62] sm:$0xff]
        %v330 = vld [vmem:[%s288 + $0x6a] sm:$0xff]
        %v331 = vld [vmem:[%s288 + $0x7a] sm:$0xff]
        %v332 = vld [vmem:[%s288 + $0x82] sm:$0xff]
        %v333 = vld [vmem:[%s288 + $0x92] sm:$0xff]
        %v334 = vld [vmem:[%s288 + $0x9a] sm:$0xff]
        %v335 = vld [vmem:[%s288 + $0xaa] sm:$0xff]
        %v336 = vld [vmem:[%s288 + $0xb2] sm:$0xff]
        %353 = vrot.lane.b32.xlu0 %v203, 4
        %v354 = vpop.permute.xlu0 %353
        %355 = vrot.lane.b32.xlu0 %v204, 4
        %v356 = vpop.permute.xlu0 %355
        %357 = vrot.lane.b32.xlu0 %v205, 4
        %v358 = vpop.permute.xlu0 %357
        %359 = vrot.lane.b32.xlu0 %v206, 4
        %v360 = vpop.permute.xlu0 %359
        %361 = vrot.lane.b32.xlu0 %v207, 4
        %v362 = vpop.permute.xlu0 %361
        %363 = vrot.lane.b32.xlu0 %v208, 4
        %v364 = vpop.permute.xlu0 %363
        %365 = vrot.lane.b32.xlu0 %v209, 4
        %v366 = vpop.permute.xlu0 %365
        %367 = vrot.lane.b32.xlu0 %v210, 4
        %v368 = vpop.permute.xlu0 %367
        %369 = vrot.lane.b32.xlu0 %v211, 4
        %v370 = vpop.permute.xlu0 %369
        %371 = vrot.lane.b32.xlu0 %v212, 4
        %v372 = vpop.permute.xlu0 %371
        %373 = vrot.lane.b32.xlu0 %v213, 4
        %v374 = vpop.permute.xlu0 %373
        %375 = vrot.lane.b32.xlu0 %v214, 4
        %v376 = vpop.permute.xlu0 %375
        %377 = vrot.lane.b32.xlu0 %v215, 4
        %v378 = vpop.permute.xlu0 %377
        %379 = vrot.lane.b32.xlu0 %v216, 4
        %v380 = vpop.permute.xlu0 %379
        %381 = vrot.lane.b32.xlu0 %v217, 4
        %v382 = vpop.permute.xlu0 %381
        %383 = vrot.lane.b32.xlu0 %v218, 4
        %v384 = vpop.permute.xlu0 %383
        %417 = vrot.lane.b32.xlu0 %v219, 8
        %v418 = vpop.permute.xlu0 %417
        %419 = vrot.lane.b32.xlu0 %v220, 8
        %v420 = vpop.permute.xlu0 %419
        %421 = vrot.lane.b32.xlu0 %v221, 8
        %v422 = vpop.permute.xlu0 %421
        %423 = vrot.lane.b32.xlu0 %v222, 8
        %v424 = vpop.permute.xlu0 %423
        %425 = vrot.lane.b32.xlu0 %v223, 8
        %v426 = vpop.permute.xlu0 %425
        %427 = vrot.lane.b32.xlu0 %v224, 8
        %v428 = vpop.permute.xlu0 %427
        %429 = vrot.lane.b32.xlu0 %v225, 8
        %v430 = vpop.permute.xlu0 %429
        %431 = vrot.lane.b32.xlu0 %v226, 8
        %v432 = vpop.permute.xlu0 %431
        %433 = vrot.lane.b32.xlu0 %v227, 8
        %v434 = vpop.permute.xlu0 %433
        %435 = vrot.lane.b32.xlu0 %v228, 8
        %v436 = vpop.permute.xlu0 %435
        %437 = vrot.lane.b32.xlu0 %v229, 8
        %v438 = vpop.permute.xlu0 %437
        %439 = vrot.lane.b32.xlu0 %v230, 8
        %v440 = vpop.permute.xlu0 %439
        %441 = vrot.lane.b32.xlu0 %v231, 8
        %v442 = vpop.permute.xlu0 %441
        %443 = vrot.lane.b32.xlu0 %v232, 8
        %v444 = vpop.permute.xlu0 %443
        %445 = vrot.lane.b32.xlu0 %v233, 8
        %v446 = vpop.permute.xlu0 %445
        %447 = vrot.lane.b32.xlu0 %v234, 8
        %v448 = vpop.permute.xlu0 %447
        %481 = vrot.lane.b32.xlu0 %v238, 12
        %v482 = vpop.permute.xlu0 %481
        %483 = vrot.lane.b32.xlu0 %v239, 12
        %v484 = vpop.permute.xlu0 %483
        %485 = vrot.lane.b32.xlu0 %v240, 12
        %v486 = vpop.permute.xlu0 %485
        %487 = vrot.lane.b32.xlu0 %v241, 12
        %v488 = vpop.permute.xlu0 %487
        %489 = vrot.lane.b32.xlu0 %v242, 12
        %v490 = vpop.permute.xlu0 %489
        %491 = vrot.lane.b32.xlu0 %v243, 12
        %v492 = vpop.permute.xlu0 %491
        %493 = vrot.lane.b32.xlu0 %v244, 12
        %v494 = vpop.permute.xlu0 %493
        %495 = vrot.lane.b32.xlu0 %v245, 12
        %v496 = vpop.permute.xlu0 %495
        %497 = vrot.lane.b32.xlu0 %v246, 12
        %v498 = vpop.permute.xlu0 %497
        %499 = vrot.lane.b32.xlu0 %v247, 12
        %v500 = vpop.permute.xlu0 %499
        %501 = vrot.lane.b32.xlu0 %v248, 12
        %v502 = vpop.permute.xlu0 %501
        %503 = vrot.lane.b32.xlu0 %v249, 12
        %v504 = vpop.permute.xlu0 %503
        %505 = vrot.lane.b32.xlu0 %v250, 12
        %v506 = vpop.permute.xlu0 %505
        %507 = vrot.lane.b32.xlu0 %v251, 12
        %v508 = vpop.permute.xlu0 %507
        %509 = vrot.lane.b32.xlu0 %v252, 12
        %v510 = vpop.permute.xlu0 %509
        %511 = vrot.lane.b32.xlu0 %v253, 12
        %v512 = vpop.permute.xlu0 %511
        %545 = vrot.lane.b32.xlu0 %v254, 16
        %v546 = vpop.permute.xlu0 %545
        %547 = vrot.lane.b32.xlu0 %v255, 16
        %v548 = vpop.permute.xlu0 %547
        %549 = vrot.lane.b32.xlu0 %v256, 16
        %v550 = vpop.permute.xlu0 %549
        %551 = vrot.lane.b32.xlu0 %v257, 16
        %v552 = vpop.permute.xlu0 %551
        %553 = vrot.lane.b32.xlu0 %v258, 16
        %v554 = vpop.permute.xlu0 %553
        %555 = vrot.lane.b32.xlu0 %v259, 16
        %v556 = vpop.permute.xlu0 %555
        %557 = vrot.lane.b32.xlu0 %v260, 16
        %v558 = vpop.permute.xlu0 %557
        %559 = vrot.lane.b32.xlu0 %v261, 16
        %v560 = vpop.permute.xlu0 %559
        %561 = vrot.lane.b32.xlu0 %v262, 16
        %v562 = vpop.permute.xlu0 %561
        %563 = vrot.lane.b32.xlu0 %v263, 16
        %v564 = vpop.permute.xlu0 %563
        %565 = vrot.lane.b32.xlu0 %v264, 16
        %v566 = vpop.permute.xlu0 %565
        %567 = vrot.lane.b32.xlu0 %v265, 16
        %v568 = vpop.permute.xlu0 %567
        %569 = vrot.lane.b32.xlu0 %v266, 16
        %v570 = vpop.permute.xlu0 %569
        %571 = vrot.lane.b32.xlu0 %v267, 16
        %v572 = vpop.permute.xlu0 %571
        %573 = vrot.lane.b32.xlu0 %v268, 16
        %v574 = vpop.permute.xlu0 %573
        %575 = vrot.lane.b32.xlu0 %v269, 16
        %v576 = vpop.permute.xlu0 %575
        %609 = vrot.lane.b32.xlu0 %v270, 20
        %v610 = vpop.permute.xlu0 %609
        %611 = vrot.lane.b32.xlu0 %v271, 20
        %v612 = vpop.permute.xlu0 %611
        %613 = vrot.lane.b32.xlu0 %v272, 20
        %v614 = vpop.permute.xlu0 %613
        %615 = vrot.lane.b32.xlu0 %v273, 20
        %v616 = vpop.permute.xlu0 %615
        %617 = vrot.lane.b32.xlu0 %v274, 20
        %v618 = vpop.permute.xlu0 %617
        %619 = vrot.lane.b32.xlu0 %v275, 20
        %v620 = vpop.permute.xlu0 %619
        %621 = vrot.lane.b32.xlu0 %v276, 20
        %v622 = vpop.permute.xlu0 %621
        %623 = vrot.lane.b32.xlu0 %v277, 20
        %v624 = vpop.permute.xlu0 %623
        %625 = vrot.lane.b32.xlu0 %v278, 20
        %v626 = vpop.permute.xlu0 %625
        %627 = vrot.lane.b32.xlu0 %v279, 20
        %v628 = vpop.permute.xlu0 %627
        %629 = vrot.lane.b32.xlu0 %v280, 20
        %v630 = vpop.permute.xlu0 %629
        %631 = vrot.lane.b32.xlu0 %v281, 20
        %v632 = vpop.permute.xlu0 %631
        %633 = vrot.lane.b32.xlu0 %v282, 20
        %v634 = vpop.permute.xlu0 %633
        %635 = vrot.lane.b32.xlu0 %v283, 20
        %v636 = vpop.permute.xlu0 %635
        %637 = vrot.lane.b32.xlu0 %v284, 20
        %v638 = vpop.permute.xlu0 %637
        %639 = vrot.lane.b32.xlu0 %v285, 20
        %v640 = vpop.permute.xlu0 %639
        %673 = vrot.lane.b32.xlu0 %v289, 24
        %v674 = vpop.permute.xlu0 %673
        %675 = vrot.lane.b32.xlu0 %v290, 24
        %v676 = vpop.permute.xlu0 %675
        %677 = vrot.lane.b32.xlu0 %v291, 24
        %v678 = vpop.permute.xlu0 %677
        %679 = vrot.lane.b32.xlu0 %v292, 24
        %v680 = vpop.permute.xlu0 %679
        %681 = vrot.lane.b32.xlu0 %v293, 24
        %v682 = vpop.permute.xlu0 %681
        %683 = vrot.lane.b32.xlu0 %v294, 24
        %v684 = vpop.permute.xlu0 %683
        %685 = vrot.lane.b32.xlu0 %v295, 24
        %v686 = vpop.permute.xlu0 %685
        %687 = vrot.lane.b32.xlu0 %v296, 24
        %v688 = vpop.permute.xlu0 %687
        %689 = vrot.lane.b32.xlu0 %v297, 24
        %v690 = vpop.permute.xlu0 %689
        %691 = vrot.lane.b32.xlu0 %v298, 24
        %v692 = vpop.permute.xlu0 %691
        %693 = vrot.lane.b32.xlu0 %v299, 24
        %v694 = vpop.permute.xlu0 %693
        %695 = vrot.lane.b32.xlu0 %v300, 24
        %v696 = vpop.permute.xlu0 %695
        %697 = vrot.lane.b32.xlu0 %v301, 24
        %v698 = vpop.permute.xlu0 %697
        %699 = vrot.lane.b32.xlu0 %v302, 24
        %v700 = vpop.permute.xlu0 %699
        %701 = vrot.lane.b32.xlu0 %v303, 24
        %v702 = vpop.permute.xlu0 %701
        %703 = vrot.lane.b32.xlu0 %v304, 24
        %v704 = vpop.permute.xlu0 %703
        %737 = vrot.lane.b32.xlu0 %v305, 28
        %v738 = vpop.permute.xlu0 %737
        %739 = vrot.lane.b32.xlu0 %v306, 28
        %v740 = vpop.permute.xlu0 %739
        %741 = vrot.lane.b32.xlu0 %v307, 28
        %v742 = vpop.permute.xlu0 %741
        %743 = vrot.lane.b32.xlu0 %v308, 28
        %v744 = vpop.permute.xlu0 %743
        %745 = vrot.lane.b32.xlu0 %v309, 28
        %v746 = vpop.permute.xlu0 %745
        %747 = vrot.lane.b32.xlu0 %v310, 28
        %v748 = vpop.permute.xlu0 %747
        %749 = vrot.lane.b32.xlu0 %v311, 28
        %v750 = vpop.permute.xlu0 %749
        %751 = vrot.lane.b32.xlu0 %v312, 28
        %v752 = vpop.permute.xlu0 %751
        %753 = vrot.lane.b32.xlu0 %v313, 28
        %v754 = vpop.permute.xlu0 %753
        %755 = vrot.lane.b32.xlu0 %v314, 28
        %v756 = vpop.permute.xlu0 %755
        %757 = vrot.lane.b32.xlu0 %v315, 28
        %v758 = vpop.permute.xlu0 %757
        %759 = vrot.lane.b32.xlu0 %v316, 28
        %v760 = vpop.permute.xlu0 %759
        %761 = vrot.lane.b32.xlu0 %v317, 28
        %v762 = vpop.permute.xlu0 %761
        %763 = vrot.lane.b32.xlu0 %v318, 28
        %v764 = vpop.permute.xlu0 %763
        %765 = vrot.lane.b32.xlu0 %v319, 28
        %v766 = vpop.permute.xlu0 %765
        %767 = vrot.lane.b32.xlu0 %v320, 28
        %v768 = vpop.permute.xlu0 %767
        %801 = vrot.lane.b32.xlu0 %v321, 32
        %v802 = vpop.permute.xlu0 %801
        %803 = vrot.lane.b32.xlu0 %v322, 32
        %v804 = vpop.permute.xlu0 %803
        %805 = vrot.lane.b32.xlu0 %v323, 32
        %v806 = vpop.permute.xlu0 %805
        %807 = vrot.lane.b32.xlu0 %v324, 32
        %v808 = vpop.permute.xlu0 %807
        %809 = vrot.lane.b32.xlu0 %v325, 32
        %v810 = vpop.permute.xlu0 %809
        %811 = vrot.lane.b32.xlu0 %v326, 32
        %v812 = vpop.permute.xlu0 %811
        %813 = vrot.lane.b32.xlu0 %v327, 32
        %v814 = vpop.permute.xlu0 %813
        %815 = vrot.lane.b32.xlu0 %v328, 32
        %v816 = vpop.permute.xlu0 %815
        %817 = vrot.lane.b32.xlu0 %v329, 32
        %v818 = vpop.permute.xlu0 %817
        %819 = vrot.lane.b32.xlu0 %v330, 32
        %v820 = vpop.permute.xlu0 %819
        %821 = vrot.lane.b32.xlu0 %v331, 32
        %v822 = vpop.permute.xlu0 %821
        %823 = vrot.lane.b32.xlu0 %v332, 32
        %v824 = vpop.permute.xlu0 %823
        %825 = vrot.lane.b32.xlu0 %v333, 32
        %v826 = vpop.permute.xlu0 %825
        %827 = vrot.lane.b32.xlu0 %v334, 32
        %v828 = vpop.permute.xlu0 %827
        %829 = vrot.lane.b32.xlu0 %v335, 32
        %v830 = vpop.permute.xlu0 %829
        %831 = vrot.lane.b32.xlu0 %v336, 32
        %v832 = vpop.permute.xlu0 %831
        %vm849 = vcmask 31744
        %v850 = vsel %vm849, %v187, %v354
        %v851 = vsel %vm849, %v188, %v356
        %v852 = vsel %vm849, %v189, %v358
        %v853 = vsel %vm849, %v190, %v360
        %v854 = vsel %vm849, %v191, %v362
        %v855 = vsel %vm849, %v192, %v364
        %v856 = vsel %vm849, %v193, %v366
        %v857 = vsel %vm849, %v194, %v368
        %v858 = vsel %vm849, %v195, %v370
        %v859 = vsel %vm849, %v196, %v372
        %v860 = vsel %vm849, %v197, %v374
        %v861 = vsel %vm849, %v198, %v376
        %v862 = vsel %vm849, %v199, %v378
        %v863 = vsel %vm849, %v200, %v380
        %v864 = vsel %vm849, %v201, %v382
        %v865 = vsel %vm849, %v202, %v384
        %vm866 = vcmask 64512
        %v867 = vsel %vm866, %v850, %v418
        %v868 = vsel %vm866, %v851, %v420
        %v869 = vsel %vm866, %v852, %v422
        %v870 = vsel %vm866, %v853, %v424
        %v871 = vsel %vm866, %v854, %v426
        %v872 = vsel %vm866, %v855, %v428
        %v873 = vsel %vm866, %v856, %v430
        %v874 = vsel %vm866, %v857, %v432
        %v875 = vsel %vm866, %v858, %v434
        %v876 = vsel %vm866, %v859, %v436
        %v877 = vsel %vm866, %v860, %v438
        %v878 = vsel %vm866, %v861, %v440
        %v879 = vsel %vm866, %v862, %v442
        %v880 = vsel %vm866, %v863, %v444
        %v881 = vsel %vm866, %v864, %v446
        %v882 = vsel %vm866, %v865, %v448
        %vm883 = vcmask 97280
        %v884 = vsel %vm883, %v867, %v482
        %v885 = vsel %vm883, %v868, %v484
        %v886 = vsel %vm883, %v869, %v486
        %v887 = vsel %vm883, %v870, %v488
        %v888 = vsel %vm883, %v871, %v490
        %v889 = vsel %vm883, %v872, %v492
        %v890 = vsel %vm883, %v873, %v494
        %v891 = vsel %vm883, %v874, %v496
        %v892 = vsel %vm883, %v875, %v498
        %v893 = vsel %vm883, %v876, %v500
        %v894 = vsel %vm883, %v877, %v502
        %v895 = vsel %vm883, %v878, %v504
        %v896 = vsel %vm883, %v879, %v506
        %v897 = vsel %vm883, %v880, %v508
        %v898 = vsel %vm883, %v881, %v510
        %v899 = vsel %vm883, %v882, %v512
        %vm900 = vcmask 130048
        %v901 = vsel %vm900, %v884, %v546
        %v902 = vsel %vm900, %v885, %v548
        %v903 = vsel %vm900, %v886, %v550
        %v904 = vsel %vm900, %v887, %v552
        %v905 = vsel %vm900, %v888, %v554
        %v906 = vsel %vm900, %v889, %v556
        %v907 = vsel %vm900, %v890, %v558
        %v908 = vsel %vm900, %v891, %v560
        %v909 = vsel %vm900, %v892, %v562
        %v910 = vsel %vm900, %v893, %v564
        %v911 = vsel %vm900, %v894, %v566
        %v912 = vsel %vm900, %v895, %v568
        %v913 = vsel %vm900, %v896, %v570
        %v914 = vsel %vm900, %v897, %v572
        %v915 = vsel %vm900, %v898, %v574
        %v916 = vsel %vm900, %v899, %v576
        %vm917 = vcmask 162816
        %v918 = vsel %vm917, %v901, %v610
        %v919 = vsel %vm917, %v902, %v612
        %v920 = vsel %vm917, %v903, %v614
        %v921 = vsel %vm917, %v904, %v616
        %v922 = vsel %vm917, %v905, %v618
        %v923 = vsel %vm917, %v906, %v620
        %v924 = vsel %vm917, %v907, %v622
        %v925 = vsel %vm917, %v908, %v624
        %v926 = vsel %vm917, %v909, %v626
        %v927 = vsel %vm917, %v910, %v628
        %v928 = vsel %vm917, %v911, %v630
        %v929 = vsel %vm917, %v912, %v632
        %v930 = vsel %vm917, %v913, %v634
        %v931 = vsel %vm917, %v914, %v636
        %v932 = vsel %vm917, %v915, %v638
        %v933 = vsel %vm917, %v916, %v640
        %vm934 = vcmask 195584
        %v935 = vsel %vm934, %v918, %v674
        %v936 = vsel %vm934, %v919, %v676
        %v937 = vsel %vm934, %v920, %v678
        %v938 = vsel %vm934, %v921, %v680
        %v939 = vsel %vm934, %v922, %v682
        %v940 = vsel %vm934, %v923, %v684
        %v941 = vsel %vm934, %v924, %v686
        %v942 = vsel %vm934, %v925, %v688
        %v943 = vsel %vm934, %v926, %v690
        %v944 = vsel %vm934, %v927, %v692
        %v945 = vsel %vm934, %v928, %v694
        %v946 = vsel %vm934, %v929, %v696
        %v947 = vsel %vm934, %v930, %v698
        %v948 = vsel %vm934, %v931, %v700
        %v949 = vsel %vm934, %v932, %v702
        %v950 = vsel %vm934, %v933, %v704
        %vm951 = vcmask 228352
        %v952 = vsel %vm951, %v935, %v738
        %v953 = vsel %vm951, %v936, %v740
        %v954 = vsel %vm951, %v937, %v742
        %v955 = vsel %vm951, %v938, %v744
        %v956 = vsel %vm951, %v939, %v746
        %v957 = vsel %vm951, %v940, %v748
        %v958 = vsel %vm951, %v941, %v750
        %v959 = vsel %vm951, %v942, %v752
        %v960 = vsel %vm951, %v943, %v754
        %v961 = vsel %vm951, %v944, %v756
        %v962 = vsel %vm951, %v945, %v758
        %v963 = vsel %vm951, %v946, %v760
        %v964 = vsel %vm951, %v947, %v762
        %v965 = vsel %vm951, %v948, %v764
        %v966 = vsel %vm951, %v949, %v766
        %v967 = vsel %vm951, %v950, %v768
        %vm968 = vcmask 261120
        %v969 = vsel %vm968, %v952, %v802
        %v970 = vsel %vm968, %v953, %v804
        %v971 = vsel %vm968, %v954, %v806
        %v972 = vsel %vm968, %v955, %v808
        %v973 = vsel %vm968, %v956, %v810
        %v974 = vsel %vm968, %v957, %v812
        %v975 = vsel %vm968, %v958, %v814
        %v976 = vsel %vm968, %v959, %v816
        %v977 = vsel %vm968, %v960, %v818
        %v978 = vsel %vm968, %v961, %v820
        %v979 = vsel %vm968, %v962, %v822
        %v980 = vsel %vm968, %v963, %v824
        %v981 = vsel %vm968, %v964, %v826
        %v982 = vsel %vm968, %v965, %v828
        %v983 = vsel %vm968, %v966, %v830
        %v984 = vsel %vm968, %v967, %v832
        %v985 = vld [vmem:[%s1] sm:$0xff]
        %v986 = vld [vmem:[%s1 + $0x8] sm:$0xff]
        %v987 = vld [vmem:[%s1 + $0x10] sm:$0xff]
        %v988 = vld [vmem:[%s1 + $0x18] sm:$0xff]
        %v989 = vld [vmem:[%s1 + $0x20] sm:$0xf]
        %v990 = vld [vmem:[%s2] sm:$0x1]
        %v992 = vlaneseq
        %v993 = vshrl.u32 %v992, 7
        %v994 = vsub.s32 0, %v993
        %v995 = vrot.slane %v990, %v994
        %vm997 = vcmask 293888
        %v999 = vsel %vm997, %v969, 0
        %v1002 = vsel %vm997, %v970, 0
        %v1005 = vsel %vm997, %v971, 0
        %v1008 = vsel %vm997, %v972, 0
        %v1011 = vsel %vm997, %v973, 0
        %v1014 = vsel %vm997, %v974, 0
        %v1017 = vsel %vm997, %v975, 0
        %v1020 = vsel %vm997, %v976, 0
        %v1023 = vsel %vm997, %v977, 0
        %v1026 = vsel %vm997, %v978, 0
        %v1029 = vsel %vm997, %v979, 0
        %v1032 = vsel %vm997, %v980, 0
        %v1035 = vsel %vm997, %v981, 0
        %v1038 = vsel %vm997, %v982, 0
        %v1041 = vsel %vm997, %v983, 0
        %v1044 = vsel %vm997, %v984, 0
        %vm1046 = vcmask 1043456
        %v1048 = vsel %vm1046, %v989, 0
        %1050 = vmatprep.subr.mxu0 0.0
        %1051 = vmatpush1.msra.mxu0 %v985
        %1052 = vmatprep.subr.mxu0 0.0
        %1053 = vmatpush1.msra.mxu0 %v986
        %1054 = vmatprep.subr.mxu0 0.0
        %1055 = vmatpush1.msra.mxu0 %v987
        %1056 = vmatprep.subr.mxu0 0.0
        %1057 = vmatpush1.msra.mxu0 %v988
        %1058 = vmatprep.subr.mxu0 0.0
        %1059 = vmatpush1.msra.mxu0 %v1048
        %1060 = vmatprep.subr.mxu0 0.0
        %1061 = vmatpush1.msra.mxu0 0.0
        %1062 = vmatprep.subr.mxu0 0.0
        %1063 = vmatpush1.msra.mxu0 0.0
        %1064 = vmatprep.subr.mxu0 0.0
        %1065 = vmatpush1.msra.mxu0 0.0
        %1066 = vmatprep.subr.mxu0 0.0
        %1067 = vmatpush1.msra.mxu0 0.0
        %1068 = vmatprep.subr.mxu0 0.0
        %1069 = vmatpush1.msra.mxu0 0.0
        %1070 = vmatprep.subr.mxu0 0.0
        %1071 = vmatpush1.msra.mxu0 0.0
        %1072 = vmatprep.subr.mxu0 0.0
        %1073 = vmatpush1.msra.mxu0 0.0
        %1074 = vmatprep.subr.mxu0 0.0
        %1075 = vmatpush1.msra.mxu0 0.0
        %1076 = vmatprep.subr.mxu0 0.0
        %1077 = vmatpush1.msra.mxu0 0.0
        %1078 = vmatprep.subr.mxu0 0.0
        %1079 = vmatpush1.msra.mxu0 0.0
        %1080 = vmatprep.subr.mxu0 0.0
        %1081 = vmatpush1.msra.mxu0 0.0
        %1082 = vmatprep.subr.mxu0 0.0
        %1083 = vmatpush1.msra.mxu0 0.0
        %1084 = vmatprep.subr.mxu0 0.0
        %1085 = vmatpush1.msra.mxu0 0.0
        %1086 = vmatprep.subr.mxu0 0.0
        %1087 = vmatpush1.msra.mxu0 0.0
        %1088 = vmatprep.subr.mxu0 0.0
        %1089 = vmatpush1.msra.mxu0 0.0
        %1090 = vmatprep.subr.mxu0 0.0
        %1091 = vmatpush1.msra.mxu0 0.0
        %1092 = vmatprep.subr.mxu0 0.0
        %1093 = vmatpush1.msra.mxu0 0.0
        %1094 = vmatprep.subr.mxu0 0.0
        %1095 = vmatpush1.msra.mxu0 0.0
        %1096 = vmatprep.subr.mxu0 0.0
        %1097 = vmatpush1.msra.mxu0 0.0
        %1098 = vmatprep.subr.mxu0 0.0
        %1099 = vmatpush1.msra.mxu0 0.0
        %1100 = vmatprep.subr.mxu0 0.0
        %1101 = vmatpush1.msra.mxu0 0.0
        %1102 = vmatprep.subr.mxu0 0.0
        %1103 = vmatpush1.msra.mxu0 0.0
        %1104 = vmatprep.subr.mxu0 0.0
        %1105 = vmatpush1.msra.mxu0 0.0
        %1106 = vmatprep.subr.mxu0 0.0
        %1107 = vmatpush1.msra.mxu0 0.0
        %1108 = vmatprep.subr.mxu0 0.0
        %1109 = vmatpush1.msra.mxu0 0.0
        %1110 = vmatprep.subr.mxu0 0.0
        %1111 = vmatpush1.msra.mxu0 0.0
        %1112 = vmatprep.subr.mxu0 0.0
        %1113 = vmatpush1.msra.mxu0 0.0
        %1114 = vmatprep.mubr.f32.mxu0 0.0
        %1115 = vmatmul.mubr.f32.gmra.mrb[0].mxu0 %v999
        %v1116 = vpop.f32.mrb[0].mxu0
        %v1117 = vadd.f32 %v995, %v1116
        %v1118 = vpop.f32.mrb[0].mxu0
        %1119 = vmatprep.mubr.f32.mxu0 0.0
        %1120 = vmatmul.mubr.f32.gmra.mrb[0].mxu0 %v1002
        %v1121 = vpop.f32.mrb[0].mxu0
        %v1122 = vadd.f32 %v995, %v1121
        %v1123 = vpop.f32.mrb[0].mxu0
        %1124 = vmatprep.mubr.f32.mxu0 0.0
        %1125 = vmatmul.mubr.f32.gmra.mrb[0].mxu0 %v1005
        %v1126 = vpop.f32.mrb[0].mxu0
        %v1127 = vadd.f32 %v995, %v1126
        %v1128 = vpop.f32.mrb[0].mxu0
        %1129 = vmatprep.mubr.f32.mxu0 0.0
        %1130 = vmatmul.mubr.f32.gmra.mrb[0].mxu0 %v1008
        %v1131 = vpop.f32.mrb[0].mxu0
        %v1132 = vadd.f32 %v995, %v1131
        %v1133 = vpop.f32.mrb[0].mxu0
        %1134 = vmatprep.mubr.f32.mxu0 0.0
        %1135 = vmatmul.mubr.f32.gmra.mrb[0].mxu0 %v1011
        %v1136 = vpop.f32.mrb[0].mxu0
        %v1137 = vadd.f32 %v995, %v1136
        %v1138 = vpop.f32.mrb[0].mxu0
        %1139 = vmatprep.mubr.f32.mxu0 0.0
        %1140 = vmatmul.mubr.f32.gmra.mrb[0].mxu0 %v1014
        %v1141 = vpop.f32.mrb[0].mxu0
        %v1142 = vadd.f32 %v995, %v1141
        %v1143 = vpop.f32.mrb[0].mxu0
        %1144 = vmatprep.mubr.f32.mxu0 0.0
        %1145 = vmatmul.mubr.f32.gmra.mrb[0].mxu0 %v1017
        %v1146 = vpop.f32.mrb[0].mxu0
        %v1147 = vadd.f32 %v995, %v1146
        %v1148 = vpop.f32.mrb[0].mxu0
        %1149 = vmatprep.mubr.f32.mxu0 0.0
        %1150 = vmatmul.mubr.f32.gmra.mrb[0].mxu0 %v1020
        %v1151 = vpop.f32.mrb[0].mxu0
        %v1152 = vadd.f32 %v995, %v1151
        %v1153 = vpop.f32.mrb[0].mxu0
        %1154 = vmatprep.mubr.f32.mxu0 0.0
        %1155 = vmatmul.mubr.f32.gmra.mrb[0].mxu0 %v1023
        %v1156 = vpop.f32.mrb[0].mxu0
        %v1157 = vadd.f32 %v995, %v1156
        %v1158 = vpop.f32.mrb[0].mxu0
        %1159 = vmatprep.mubr.f32.mxu0 0.0
        %1160 = vmatmul.mubr.f32.gmra.mrb[0].mxu0 %v1026
        %v1161 = vpop.f32.mrb[0].mxu0
        %v1162 = vadd.f32 %v995, %v1161
        %v1163 = vpop.f32.mrb[0].mxu0
        %1164 = vmatprep.mubr.f32.mxu0 0.0
        %1165 = vmatmul.mubr.f32.gmra.mrb[0].mxu0 %v1029
        %v1166 = vpop.f32.mrb[0].mxu0
        %v1167 = vadd.f32 %v995, %v1166
        %v1168 = vpop.f32.mrb[0].mxu0
        %1169 = vmatprep.mubr.f32.mxu0 0.0
        %1170 = vmatmul.mubr.f32.gmra.mrb[0].mxu0 %v1032
        %v1171 = vpop.f32.mrb[0].mxu0
        %v1172 = vadd.f32 %v995, %v1171
        %v1173 = vpop.f32.mrb[0].mxu0
        %1174 = vmatprep.mubr.f32.mxu0 0.0
        %1175 = vmatmul.mubr.f32.gmra.mrb[0].mxu0 %v1035
        %v1176 = vpop.f32.mrb[0].mxu0
        %v1177 = vadd.f32 %v995, %v1176
        %v1178 = vpop.f32.mrb[0].mxu0
        %1179 = vmatprep.mubr.f32.mxu0 0.0
        %1180 = vmatmul.mubr.f32.gmra.mrb[0].mxu0 %v1038
        %v1181 = vpop.f32.mrb[0].mxu0
        %v1182 = vadd.f32 %v995, %v1181
        %v1183 = vpop.f32.mrb[0].mxu0
        %1184 = vmatprep.mubr.f32.mxu0 0.0
        %1185 = vmatmul.mubr.f32.gmra.mrb[0].mxu0 %v1041
        %v1186 = vpop.f32.mrb[0].mxu0
        %v1187 = vadd.f32 %v995, %v1186
        %v1188 = vpop.f32.mrb[0].mxu0
        %1189 = vmatprep.mubr.f32.mxu0 0.0
        %1190 = vmatmul.mubr.f32.gmra.mrb[0].mxu0 %v1044
        %v1191 = vpop.f32.mrb[0].mxu0
        %v1192 = vadd.f32 %v995, %v1191
        %v1193 = vpop.f32.mrb[0].mxu0
        %1194 = vdwg.mxu0
        %1195 = vst [vmem:[%s177] sm:$0xff] %v1117
        %1196 = vst [vmem:[%s177 + $0x8] sm:$0xff] %v1122
        %1197 = vst [vmem:[%s177 + $0x10] sm:$0xff] %v1127
        %1198 = vst [vmem:[%s177 + $0x18] sm:$0xff] %v1132
        %1199 = vst [vmem:[%s177 + $0x20] sm:$0xff] %v1137
        %1200 = vst [vmem:[%s177 + $0x28] sm:$0xff] %v1142
        %1201 = vst [vmem:[%s177 + $0x30] sm:$0xff] %v1147
        %1202 = vst [vmem:[%s177 + $0x38] sm:$0xff] %v1152
        %1203 = vst [vmem:[%s177 + $0x40] sm:$0xff] %v1157
        %1204 = vst [vmem:[%s177 + $0x48] sm:$0xff] %v1162
        %1205 = vst [vmem:[%s177 + $0x50] sm:$0xff] %v1167
        %1206 = vst [vmem:[%s177 + $0x58] sm:$0xff] %v1172
        %1207 = vst [vmem:[%s177 + $0x60] sm:$0xff] %v1177
        %1208 = vst [vmem:[%s177 + $0x68] sm:$0xff] %v1182
        %1209 = vst [vmem:[%s177 + $0x70] sm:$0xff] %v1187
        %1210 = vst [vmem:[%s177 + $0x78] sm:$0xff] %v1192
        %s1211 = sand.u32 %s107, 1
        %s1212 = scalar_lea.sflag [#allocation3], %s1211
        %s1213 = sand.u32 %s107, 1
        %s1214 = smul.addr %s1213, 128
        %s1215 = scalar_lea.vmem [#allocation2], %s1214
        // Predicated region
        $region33: #{tpu_custom_call.1} parent=31 // pred_check
          %p1216 = pneg %p117
        $region34: #{tpu_custom_call.1} parent=31 // pred_check_branch
          %1218 = sbr.rel (%p1216) target = $region36
        $region35: #{tpu_custom_call.1} parent=31 // pred_region
          %s1219 = smul.u32 8, %s22
          %s1221 = ssub.s32 2048, 2048
          %1222 = vsyncadd %s1212, %s1221
          %s1223 = smul.addr %s1219, 2
          %s1224 = smul.addr %s21, 32
          %s1225 = sadd.s32 %s1223, %s1224
          %s1226 = smul.addr %s1225, 128
          %s1227 = scalar_lea.hbm %s3, %s1226
          %s1228 = sshll.u32 %s1215, 4
          %s1229 = int_to_ptr.vmem [resolvable:$true] %s1228
          %1234 = dma.vmem_to_hbm [thread:$0]  %s1229, 2048, %s1227, %s1212, 128, 128, 8
        $region36: #{tpu_custom_call.1} parent=31 // pred_fallthru
          _
      $region32: #{tpu_custom_call.1} parent=5 // pred_fallthru
        _
      %p1235 = scmp.le.s32.totalorder 2, %s12
      // Predicated region
      $region37: #{tpu_custom_call.1} parent=5 // pred_check
        %p1236 = pneg %p1235
      $region38: #{tpu_custom_call.1} parent=5 // pred_check_branch
        %1238 = sbr.rel (%p1236) target = $region40
      $region39: #{tpu_custom_call.1} parent=5 // pred_region
        %s1239 = ssub.s32 %s12, 2
        // Predicated region
        $region41: #{tpu_custom_call.1} parent=39 // pred_check
          %p1240 = pneg %p123
        $region42: #{tpu_custom_call.1} parent=39 // pred_check_branch
          %1242 = sbr.rel (%p1240) target = $region44
        $region43: #{tpu_custom_call.1} parent=39 // pred_region
          %s1243 = sand.u32 %s108, 1
          %s1244 = scalar_lea.sflag [#allocation3], %s1243
          %s1245 = sand.u32 %s108, 1
          %s1246 = smul.addr %s1245, 128
          %s1247 = scalar_lea.vmem [#allocation2], %s1246
          %1248 = dma.done %s1244, 2048
        $region44: #{tpu_custom_call.1} parent=39 // pred_fallthru
          _
      $region40: #{tpu_custom_call.1} parent=5 // pred_fallthru
        _
    $region6: #{tpu_custom_call.1} parent=1 // loop_footer
      %s16 = sadd.s32 1, %s12
    $region7: #{tpu_custom_call.1} parent=1 // loop_footer_branch
      %11 = sbr.rel target = $region3
    $region8: #{tpu_custom_call.1} parent=1 // loop_exit
      _
    %1249 = vsyncpa [#allocation3], 1
    %s1250 = scalar_lea.sflag [#allocation3], 1
    %1251 = vsyncpa %s1250, 1

</llo_original>
